<compile_context>
chip_gen: v7x
topology: tpu7x:2x2x1
jax: 0.10.0
libtpu: 0.0.40
codegen_flags: <defaults>
</compile_context>

<pallas_src>
import functools
import math

import jax
import jax.numpy as jnp
from jax.experimental import pallas as pl
from jax.experimental.pallas import tpu as pltpu

_BN_SCALE = 1.0 / math.sqrt(1.0 + 1e-5)  # BatchNorm folded at default eval running stats


def _attn_kernel(x_ref, sg_mat_ref, eca_w_ref, o_ref, *, dilations):
    bt, C, HW = x_ref.shape
    BC = bt * C
    # Flatten (bt, C, HW) -> (bt*C, HW): HW stays dense on lanes (free when C % 8 == 0).
    x = x_ref[...].reshape(BC, HW).astype(jnp.float32)

    # ---------------- Mul_parallel_dailted_eca_layer ----------------
    y = jnp.mean(x, axis=1, keepdims=True)                 # global avg pool -> (bt*C, 1)
    cidx = jax.lax.rem(jax.lax.broadcasted_iota(jnp.int32, (BC, 1), 0), C)

    def shift_c(off):
        # y[b, c + off], zero padded per batch element.  The roll wraps across batch
        # boundaries, but every wrapped row has c + off outside [0, C) and gets masked.
        rolled = pltpu.roll(y, shift=(-off) % BC, axis=0)
        keep = jnp.logical_and(cidx + off >= 0, cidx + off < C)
        return jnp.where(keep, rolled, 0.0)

    # Hoisted: one roll + mask per distinct offset (8 total), shared by all 4 branches.
    offs = sorted({s * d for d in dilations for s in (-1, 1)})
    sh = {off: shift_c(off) for off in offs}

    # 4 independent dilated 3-tap Conv1d branches; sigmoid per branch, then summed
    # (the module sums AFTER the per-branch sigmoids, so the taps cannot be pre-combined).
    branch = []
    for b, d in enumerate(dilations):
        conv_b = (eca_w_ref[b, 0] * sh[-d]
                  + eca_w_ref[b, 1] * y
                  + eca_w_ref[b, 2] * sh[d])
        branch.append(jax.nn.sigmoid(conv_b))
    ch = ((branch[0] + branch[1]) + (branch[2] + branch[3])) * _BN_SCALE   # (bt*C, 1)
    sc = jnp.maximum(x * ch, 0.0)                          # sum_b x*sig_b -> BN -> ReLU

    # ---------------- SpatialGate (CBAM, 7x7, 2 -> 1) ----------------
    sc3 = sc.reshape(bt, C, HW)
    cmax = jnp.max(sc3, axis=1)                            # (bt, HW) ChannelPool max
    cmean = jnp.mean(sc3, axis=1)                          # (bt, HW) ChannelPool mean
    # One K-stacked MXU matmul: row b of the LHS is [cmax_b || cmean_b]; the RHS stacks the
    # max-plane matrix over the mean-plane matrix along the contraction dim, so
    # conv = cmax @ M_max + cmean @ M_mean for every batch element in one pass.
    lhs = jnp.concatenate([cmax, cmean], axis=1)           # (bt, 2*HW)
    if bt < 8:                                             # pad to one full sublane tile
        lhs = jnp.concatenate([lhs, jnp.zeros((8 - bt, 2 * HW), jnp.float32)], axis=0)
    conv = jnp.dot(lhs.astype(sg_mat_ref.dtype), sg_mat_ref[...],
                   preferred_element_type=jnp.float32)     # (8, HW), f32 accumulation
    scale = jax.nn.sigmoid(conv[:bt] * _BN_SCALE)          # (bt, HW), folded BatchNorm2d(1)
    o_ref[...] = (sc3 * scale[:, None, :]).astype(o_ref.dtype)


def _spatial_conv_matrix(sg_w, H, W):
    """Fold Conv2d(2, 1, k, padding=(k-1)//2, bias=False) + its zero padding into one dense
    K-stacked matrix M of shape (2*H*W, H*W) so conv_flat = [max_flat || mean_flat] @ M.

    sg_w: (2, k, k); channel 0 applies to the max plane, channel 1 to the mean plane.
    """
    sg_w = sg_w.astype(jnp.float32)
    k = sg_w.shape[-1]
    p = (k - 1) // 2
    dh = jnp.arange(H)[:, None] - jnp.arange(H)[None, :]          # h_src - h_dst
    dw = jnp.arange(W)[:, None] - jnp.arange(W)[None, :]          # w_src - w_dst
    ih = jnp.clip(dh + p, 0, k - 1)
    iw = jnp.clip(dw + p, 0, k - 1)
    valid = (jnp.abs(dh) <= p)[:, :, None, None] & (jnp.abs(dw) <= p)[None, None, :, :]
    m = sg_w[:, ih][:, :, :, iw]                                   # (2, Hs, Hd, Ws, Wd)
    m = m * valid[None].astype(jnp.float32)
    m = m.transpose(0, 1, 3, 2, 4).reshape(2, H * W, H * W)        # rows=(hs,ws), cols=(hd,wd)
    return m.reshape(2 * H * W, H * W)                             # K-stack: [M_max; M_mean]


def _choose_batch_tile(B, max_bt=8):
    """Batch elements per grid step: must divide B, at most 8 (one MXU sublane tile of
    K-stacked ChannelPool rows), and leave >= 2 grid steps when possible so the "parallel"
    batch axis can shard across both v7x TensorCores (v5e/v6e are single-TC and only gain
    the per-step overhead amortization)."""
    divisors = [d for d in range(1, min(B, max_bt) + 1) if B % d == 0]
    two_step = [d for d in divisors if B // d >= 2]
    return max(two_step) if two_step else max(divisors)


def mul_parallel_dailted_eca_with_cbam(x, eca_w, sg_w, *, strid=1, mxu_dtype=jnp.bfloat16):
    """x: (B, C, H, W). eca_w: (4, 3) Conv1d taps (branch rates 1, 2*strid, 3*strid, 4*strid).
    sg_w: (2, 7, 7) SpatialGate Conv2d(2->1) weights (max plane first).
    mxu_dtype: dtype of the folded 7x7 conv matrix / MXU operands (accumulation stays f32)."""
    B, C, H, W = x.shape
    HW = H * W
    dilations = tuple([1] + [strid * r for r in (2, 3, 4)])
    bt = _choose_batch_tile(B)
    steps = B // bt

    x_flat = x.reshape(B, C, HW)                                  # lane-dense view (free)
    sg_mat = _spatial_conv_matrix(sg_w, H, W).astype(mxu_dtype)   # (2*HW, HW)
    eca_w = eca_w.astype(jnp.float32)

    # TODO(synk): the dense (2*HW, HW) conv-matrix formulation targets small/medium feature
    # maps; for HW >= ~1024 (especially v7x with 64 MiB VMEM) switch to a banded / H-tiled
    # 49-tap formulation (halo of 3 rows) and single-buffer the resident matrix.
    in_bytes = x.dtype.itemsize
    sg_bytes = jnp.dtype(mxu_dtype).itemsize
    x_blk = bt * C * HW * in_bytes
    sg_blk = 2 * HW * HW * sg_bytes
    # Real live set: double-buffered x/out blocks, the resident conv matrix (constant index
    # map -> DMA'd once, but still allocated with 2 buffers by the pipeliner), the f32
    # working copies of the block (x, sc, scaled product) and the tiny MXU operands/results,
    # plus ~25% headroom -- instead of the previous blanket 32-48 MiB request.
    live = 4 * x_blk + 2 * sg_blk + 3 * bt * C * HW * 4 + 8 * 3 * HW * 4
    vmem_limit = int(min(max(int(live * 1.25), 4 << 20), 64 << 20))

    cost = pl.CostEstimate(
        flops=int(steps * 2 * 8 * (2 * HW) * HW + 14 * B * C * HW),
        transcendentals=int(B * HW + 4 * B * C),
        bytes_accessed=int(2 * B * C * HW * in_bytes + 2 * HW * HW * sg_bytes + eca_w.size * 4),
    )

    kernel = functools.partial(_attn_kernel, dilations=dilations)
    out_flat = pl.pallas_call(
        kernel,
        out_shape=jax.ShapeDtypeStruct((B, C, HW), x.dtype),
        grid=(steps,),
        in_specs=[
            pl.BlockSpec((bt, C, HW), lambda i: (i, 0, 0)),       # bt batch elements / step
            pl.BlockSpec((2 * HW, HW), lambda i: (0, 0)),         # conv matrix stays resident
            pl.BlockSpec(memory_space=pltpu.MemorySpace.SMEM),    # (4, 3) ECA taps as scalars
        ],
        out_specs=pl.BlockSpec((bt, C, HW), lambda i: (i, 0, 0)),
        compiler_params=pltpu.CompilerParams(
            dimension_semantics=("parallel",),                    # batch steps independent
            vmem_limit_bytes=vmem_limit,
        ),
        cost_estimate=cost,
    )(x_flat, sg_mat, eca_w)
    return out_flat.reshape(B, C, H, W)


def _reference(x, eca_w, sg_w, *, strid=1):
    """Plain-JAX (f32) mirror of the PyTorch forward (verification only)."""
    dil = [1] + [strid * r for r in (2, 3, 4)]
    hi = jax.lax.Precision.HIGHEST
    y = jnp.mean(x, axis=(2, 3))[:, None, :]                      # (B, 1, C)
    acc = jnp.zeros_like(x)
    for b, d in enumerate(dil):                                   # sum of per-branch ECA outputs
        c = jax.lax.conv_general_dilated(
            y, eca_w[b].reshape(1, 1, 3), window_strides=(1,), padding=[(d, d)],
            rhs_dilation=(d,), dimension_numbers=("NCH", "OIH", "NCH"), precision=hi)
        acc = acc + x * jax.nn.sigmoid(c)[:, 0, :, None, None]
    sc = jnp.maximum(acc * _BN_SCALE, 0.0)                        # BN (eval defaults) + ReLU
    cp = jnp.stack([jnp.max(sc, axis=1), jnp.mean(sc, axis=1)], axis=1)   # ChannelPool
    conv = jax.lax.conv_general_dilated(
        cp, sg_w[None].astype(x.dtype), window_strides=(1, 1), padding=[(3, 3), (3, 3)],
        dimension_numbers=("NCHW", "OIHW", "NCHW"), precision=hi)
    return sc * jax.nn.sigmoid(conv * _BN_SCALE)


if __name__ == "__main__":
    key = jax.random.PRNGKey(0)
    kx, k1, k2 = jax.random.split(key, 3)
    B, C, H, W = 2, 16, 16, 16
    x = jax.random.normal(kx, (B, C, H, W), jnp.float32)
    # deterministic synthetic parameters (shapes implied by the module __init__, strid=1)
    eca_w = jax.random.normal(k1, (4, 3), jnp.float32) * 0.3      # 4x Conv1d(1,1,3,bias=False)
    sg_w = jax.random.normal(k2, (2, 7, 7), jnp.float32) * 0.1    # SpatialGate Conv2d(2,1,7)

    ref = jax.block_until_ready(_reference(x, eca_w, sg_w, strid=1))

    # Exact-precision path (f32 MXU operands) -> tight tolerance against the f32 reference.
    out_f32 = jax.block_until_ready(
        mul_parallel_dailted_eca_with_cbam(x, eca_w, sg_w, strid=1, mxu_dtype=jnp.float32))
    assert out_f32.shape == x.shape and out_f32.dtype == x.dtype
    err_f32 = float(jnp.max(jnp.abs(out_f32 - ref)))
    assert jnp.allclose(out_f32, ref, atol=5e-4, rtol=5e-4), err_f32

    # Default path: bf16 folded conv matrix + bf16 MXU operands, f32 accumulation.
    # The residual error is dominated by bf16 (~2^-9 relative) quantization of the pooled
    # planes / conv taps feeding a sigmoid gate, so the bound is correspondingly looser.
    out_bf16 = jax.block_until_ready(
        mul_parallel_dailted_eca_with_cbam(x, eca_w, sg_w, strid=1))
    assert out_bf16.shape == x.shape and out_bf16.dtype == x.dtype
    err_bf16 = float(jnp.max(jnp.abs(out_bf16 - ref)))
    assert err_bf16 < 1e-1, err_bf16

    print("KERNEL_OK")
</pallas_src>

<mosaic_0001>
module attributes {stable_mosaic.version = 11 : i64} {
  func.func @_attn_kernel(%arg0: i32, %arg1: memref<1x16x256xf32, #tpu.memory_space<vmem>>, %arg2: memref<512x256xf32, #tpu.memory_space<vmem>>, %arg3: memref<4x3xf32, #tpu.memory_space<smem>>, %arg4: memref<1x16x256xf32, #tpu.memory_space<vmem>>) attributes {dimension_semantics = [#tpu.dimension_semantics<parallel>], iteration_bounds = array<i64: 2>, scalar_prefetch = 0 : i64, scratch_operands = 0 : i64, tpu.core_type = #tpu.core_type<tc>, window_params = [{transform_indices = @transform_0, window_bounds = array<i64: 1, 16, 256>}, {pipeline_mode = #tpu.pipeline_mode<synchronous>, transform_indices = @transform_1, window_bounds = array<i64: 512, 256>}, {transform_indices = @transform_2, window_bounds = array<i64: 4, 3>}, {transform_indices = @transform_3, window_bounds = array<i64: 1, 16, 256>}]} {
    %c0 = arith.constant 0 : index
    %c0_0 = arith.constant 0 : index
    %c0_1 = arith.constant 0 : index
    %0 = vector.load %arg1[%c0, %c0_0, %c0_1] : memref<1x16x256xf32, #tpu.memory_space<vmem>>, vector<1x16x256xf32>
    %1 = vector.shape_cast %0 : vector<1x16x256xf32> to vector<16x256xf32>
    %cst = arith.constant dense<0.000000e+00> : vector<16xf32>
    %2 = vector.multi_reduction <add>, %1, %cst [1] : vector<16x256xf32> to vector<16xf32>
    %3 = vector.shape_cast %2 : vector<16xf32> to vector<16x1xf32>
    %cst_2 = arith.constant 2.560000e+02 : f32
    %4 = vector.broadcast %cst_2 : f32 to vector<16x1xf32>
    %5 = arith.divf %3, %4 : vector<16x1xf32>
    %6 = tpu.iota {dimensions = array<i32: 0>} : vector<16x1xi32>
    %c16_i32 = arith.constant 16 : i32
    %7 = vector.broadcast %c16_i32 : i32 to vector<16x1xi32>
    %8 = arith.remsi %6, %7 : vector<16x1xi32>
    %c4_i32 = arith.constant 4 : i32
    %9 = tpu.dynamic_rotate %5 by %c4_i32 dim 0 : vector<16x1xf32>, i32 -> vector<16x1xf32>
    %c-4_i32 = arith.constant -4 : i32
    %10 = vector.broadcast %c-4_i32 : i32 to vector<16x1xi32>
    %11 = arith.addi %8, %10 : vector<16x1xi32>
    %c0_i32 = arith.constant 0 : i32
    %12 = vector.broadcast %c0_i32 : i32 to vector<16x1xi32>
    %13 = arith.cmpi sge, %11, %12 : vector<16x1xi32>
    %c-4_i32_3 = arith.constant -4 : i32
    %14 = vector.broadcast %c-4_i32_3 : i32 to vector<16x1xi32>
    %15 = arith.addi %8, %14 : vector<16x1xi32>
    %c16_i32_4 = arith.constant 16 : i32
    %16 = vector.broadcast %c16_i32_4 : i32 to vector<16x1xi32>
    %17 = arith.cmpi slt, %15, %16 : vector<16x1xi32>
    %18 = arith.andi %13, %17 : vector<16x1xi1>
    %cst_5 = arith.constant 0.000000e+00 : f32
    %19 = vector.broadcast %cst_5 : f32 to vector<16x1xf32>
    %20 = arith.select %18, %9, %19 : vector<16x1xi1>, vector<16x1xf32>
    %c3_i32 = arith.constant 3 : i32
    %21 = tpu.dynamic_rotate %5 by %c3_i32 dim 0 : vector<16x1xf32>, i32 -> vector<16x1xf32>
    %c-3_i32 = arith.constant -3 : i32
    %22 = vector.broadcast %c-3_i32 : i32 to vector<16x1xi32>
    %23 = arith.addi %8, %22 : vector<16x1xi32>
    %c0_i32_6 = arith.constant 0 : i32
    %24 = vector.broadcast %c0_i32_6 : i32 to vector<16x1xi32>
    %25 = arith.cmpi sge, %23, %24 : vector<16x1xi32>
    %c-3_i32_7 = arith.constant -3 : i32
    %26 = vector.broadcast %c-3_i32_7 : i32 to vector<16x1xi32>
    %27 = arith.addi %8, %26 : vector<16x1xi32>
    %c16_i32_8 = arith.constant 16 : i32
    %28 = vector.broadcast %c16_i32_8 : i32 to vector<16x1xi32>
    %29 = arith.cmpi slt, %27, %28 : vector<16x1xi32>
    %30 = arith.andi %25, %29 : vector<16x1xi1>
    %cst_9 = arith.constant 0.000000e+00 : f32
    %31 = vector.broadcast %cst_9 : f32 to vector<16x1xf32>
    %32 = arith.select %30, %21, %31 : vector<16x1xi1>, vector<16x1xf32>
    %c2_i32 = arith.constant 2 : i32
    %33 = tpu.dynamic_rotate %5 by %c2_i32 dim 0 : vector<16x1xf32>, i32 -> vector<16x1xf32>
    %c-2_i32 = arith.constant -2 : i32
    %34 = vector.broadcast %c-2_i32 : i32 to vector<16x1xi32>
    %35 = arith.addi %8, %34 : vector<16x1xi32>
    %c0_i32_10 = arith.constant 0 : i32
    %36 = vector.broadcast %c0_i32_10 : i32 to vector<16x1xi32>
    %37 = arith.cmpi sge, %35, %36 : vector<16x1xi32>
    %c-2_i32_11 = arith.constant -2 : i32
    %38 = vector.broadcast %c-2_i32_11 : i32 to vector<16x1xi32>
    %39 = arith.addi %8, %38 : vector<16x1xi32>
    %c16_i32_12 = arith.constant 16 : i32
    %40 = vector.broadcast %c16_i32_12 : i32 to vector<16x1xi32>
    %41 = arith.cmpi slt, %39, %40 : vector<16x1xi32>
    %42 = arith.andi %37, %41 : vector<16x1xi1>
    %cst_13 = arith.constant 0.000000e+00 : f32
    %43 = vector.broadcast %cst_13 : f32 to vector<16x1xf32>
    %44 = arith.select %42, %33, %43 : vector<16x1xi1>, vector<16x1xf32>
    %c1_i32 = arith.constant 1 : i32
    %45 = tpu.dynamic_rotate %5 by %c1_i32 dim 0 : vector<16x1xf32>, i32 -> vector<16x1xf32>
    %c-1_i32 = arith.constant -1 : i32
    %46 = vector.broadcast %c-1_i32 : i32 to vector<16x1xi32>
    %47 = arith.addi %8, %46 : vector<16x1xi32>
    %c0_i32_14 = arith.constant 0 : i32
    %48 = vector.broadcast %c0_i32_14 : i32 to vector<16x1xi32>
    %49 = arith.cmpi sge, %47, %48 : vector<16x1xi32>
    %c-1_i32_15 = arith.constant -1 : i32
    %50 = vector.broadcast %c-1_i32_15 : i32 to vector<16x1xi32>
    %51 = arith.addi %8, %50 : vector<16x1xi32>
    %c16_i32_16 = arith.constant 16 : i32
    %52 = vector.broadcast %c16_i32_16 : i32 to vector<16x1xi32>
    %53 = arith.cmpi slt, %51, %52 : vector<16x1xi32>
    %54 = arith.andi %49, %53 : vector<16x1xi1>
    %cst_17 = arith.constant 0.000000e+00 : f32
    %55 = vector.broadcast %cst_17 : f32 to vector<16x1xf32>
    %56 = arith.select %54, %45, %55 : vector<16x1xi1>, vector<16x1xf32>
    %c15_i32 = arith.constant 15 : i32
    %57 = tpu.dynamic_rotate %5 by %c15_i32 dim 0 : vector<16x1xf32>, i32 -> vector<16x1xf32>
    %c1_i32_18 = arith.constant 1 : i32
    %58 = vector.broadcast %c1_i32_18 : i32 to vector<16x1xi32>
    %59 = arith.addi %8, %58 : vector<16x1xi32>
    %c0_i32_19 = arith.constant 0 : i32
    %60 = vector.broadcast %c0_i32_19 : i32 to vector<16x1xi32>
    %61 = arith.cmpi sge, %59, %60 : vector<16x1xi32>
    %c1_i32_20 = arith.constant 1 : i32
    %62 = vector.broadcast %c1_i32_20 : i32 to vector<16x1xi32>
    %63 = arith.addi %8, %62 : vector<16x1xi32>
    %c16_i32_21 = arith.constant 16 : i32
    %64 = vector.broadcast %c16_i32_21 : i32 to vector<16x1xi32>
    %65 = arith.cmpi slt, %63, %64 : vector<16x1xi32>
    %66 = arith.andi %61, %65 : vector<16x1xi1>
    %cst_22 = arith.constant 0.000000e+00 : f32
    %67 = vector.broadcast %cst_22 : f32 to vector<16x1xf32>
    %68 = arith.select %66, %57, %67 : vector<16x1xi1>, vector<16x1xf32>
    %c14_i32 = arith.constant 14 : i32
    %69 = tpu.dynamic_rotate %5 by %c14_i32 dim 0 : vector<16x1xf32>, i32 -> vector<16x1xf32>
    %c2_i32_23 = arith.constant 2 : i32
    %70 = vector.broadcast %c2_i32_23 : i32 to vector<16x1xi32>
    %71 = arith.addi %8, %70 : vector<16x1xi32>
    %c0_i32_24 = arith.constant 0 : i32
    %72 = vector.broadcast %c0_i32_24 : i32 to vector<16x1xi32>
    %73 = arith.cmpi sge, %71, %72 : vector<16x1xi32>
    %c2_i32_25 = arith.constant 2 : i32
    %74 = vector.broadcast %c2_i32_25 : i32 to vector<16x1xi32>
    %75 = arith.addi %8, %74 : vector<16x1xi32>
    %c16_i32_26 = arith.constant 16 : i32
    %76 = vector.broadcast %c16_i32_26 : i32 to vector<16x1xi32>
    %77 = arith.cmpi slt, %75, %76 : vector<16x1xi32>
    %78 = arith.andi %73, %77 : vector<16x1xi1>
    %cst_27 = arith.constant 0.000000e+00 : f32
    %79 = vector.broadcast %cst_27 : f32 to vector<16x1xf32>
    %80 = arith.select %78, %69, %79 : vector<16x1xi1>, vector<16x1xf32>
    %c13_i32 = arith.constant 13 : i32
    %81 = tpu.dynamic_rotate %5 by %c13_i32 dim 0 : vector<16x1xf32>, i32 -> vector<16x1xf32>
    %c3_i32_28 = arith.constant 3 : i32
    %82 = vector.broadcast %c3_i32_28 : i32 to vector<16x1xi32>
    %83 = arith.addi %8, %82 : vector<16x1xi32>
    %c0_i32_29 = arith.constant 0 : i32
    %84 = vector.broadcast %c0_i32_29 : i32 to vector<16x1xi32>
    %85 = arith.cmpi sge, %83, %84 : vector<16x1xi32>
    %c3_i32_30 = arith.constant 3 : i32
    %86 = vector.broadcast %c3_i32_30 : i32 to vector<16x1xi32>
    %87 = arith.addi %8, %86 : vector<16x1xi32>
    %c16_i32_31 = arith.constant 16 : i32
    %88 = vector.broadcast %c16_i32_31 : i32 to vector<16x1xi32>
    %89 = arith.cmpi slt, %87, %88 : vector<16x1xi32>
    %90 = arith.andi %85, %89 : vector<16x1xi1>
    %cst_32 = arith.constant 0.000000e+00 : f32
    %91 = vector.broadcast %cst_32 : f32 to vector<16x1xf32>
    %92 = arith.select %90, %81, %91 : vector<16x1xi1>, vector<16x1xf32>
    %c12_i32 = arith.constant 12 : i32
    %93 = tpu.dynamic_rotate %5 by %c12_i32 dim 0 : vector<16x1xf32>, i32 -> vector<16x1xf32>
    %c4_i32_33 = arith.constant 4 : i32
    %94 = vector.broadcast %c4_i32_33 : i32 to vector<16x1xi32>
    %95 = arith.addi %8, %94 : vector<16x1xi32>
    %c0_i32_34 = arith.constant 0 : i32
    %96 = vector.broadcast %c0_i32_34 : i32 to vector<16x1xi32>
    %97 = arith.cmpi sge, %95, %96 : vector<16x1xi32>
    %c4_i32_35 = arith.constant 4 : i32
    %98 = vector.broadcast %c4_i32_35 : i32 to vector<16x1xi32>
    %99 = arith.addi %8, %98 : vector<16x1xi32>
    %c16_i32_36 = arith.constant 16 : i32
    %100 = vector.broadcast %c16_i32_36 : i32 to vector<16x1xi32>
    %101 = arith.cmpi slt, %99, %100 : vector<16x1xi32>
    %102 = arith.andi %97, %101 : vector<16x1xi1>
    %cst_37 = arith.constant 0.000000e+00 : f32
    %103 = vector.broadcast %cst_37 : f32 to vector<16x1xf32>
    %104 = arith.select %102, %93, %103 : vector<16x1xi1>, vector<16x1xf32>
    %c0_38 = arith.constant 0 : index
    %c0_39 = arith.constant 0 : index
    %105 = memref.load %arg3[%c0_38, %c0_39] : memref<4x3xf32, #tpu.memory_space<smem>>
    %106 = vector.broadcast %105 : f32 to vector<16x1xf32>
    %107 = arith.mulf %106, %56 : vector<16x1xf32>
    %c0_40 = arith.constant 0 : index
    %c1 = arith.constant 1 : index
    %108 = memref.load %arg3[%c0_40, %c1] : memref<4x3xf32, #tpu.memory_space<smem>>
    %109 = vector.broadcast %108 : f32 to vector<16x1xf32>
    %110 = arith.mulf %109, %5 : vector<16x1xf32>
    %111 = arith.addf %107, %110 : vector<16x1xf32>
    %c0_41 = arith.constant 0 : index
    %c2 = arith.constant 2 : index
    %112 = memref.load %arg3[%c0_41, %c2] : memref<4x3xf32, #tpu.memory_space<smem>>
    %113 = vector.broadcast %112 : f32 to vector<16x1xf32>
    %114 = arith.mulf %113, %68 : vector<16x1xf32>
    %115 = arith.addf %111, %114 : vector<16x1xf32>
    %116 = arith.negf %115 : vector<16x1xf32>
    %117 = math.exp %116 : vector<16x1xf32>
    %cst_42 = arith.constant 1.000000e+00 : f32
    %118 = vector.broadcast %cst_42 : f32 to vector<16x1xf32>
    %119 = arith.addf %118, %117 : vector<16x1xf32>
    %120 = arith.divf %118, %119 : vector<16x1xf32>
    %c1_43 = arith.constant 1 : index
    %c0_44 = arith.constant 0 : index
    %121 = memref.load %arg3[%c1_43, %c0_44] : memref<4x3xf32, #tpu.memory_space<smem>>
    %122 = vector.broadcast %121 : f32 to vector<16x1xf32>
    %123 = arith.mulf %122, %44 : vector<16x1xf32>
    %c1_45 = arith.constant 1 : index
    %c1_46 = arith.constant 1 : index
    %124 = memref.load %arg3[%c1_45, %c1_46] : memref<4x3xf32, #tpu.memory_space<smem>>
    %125 = vector.broadcast %124 : f32 to vector<16x1xf32>
    %126 = arith.mulf %125, %5 : vector<16x1xf32>
    %127 = arith.addf %123, %126 : vector<16x1xf32>
    %c1_47 = arith.constant 1 : index
    %c2_48 = arith.constant 2 : index
    %128 = memref.load %arg3[%c1_47, %c2_48] : memref<4x3xf32, #tpu.memory_space<smem>>
    %129 = vector.broadcast %128 : f32 to vector<16x1xf32>
    %130 = arith.mulf %129, %80 : vector<16x1xf32>
    %131 = arith.addf %127, %130 : vector<16x1xf32>
    %132 = arith.negf %131 : vector<16x1xf32>
    %133 = math.exp %132 : vector<16x1xf32>
    %cst_49 = arith.constant 1.000000e+00 : f32
    %134 = vector.broadcast %cst_49 : f32 to vector<16x1xf32>
    %135 = arith.addf %134, %133 : vector<16x1xf32>
    %136 = arith.divf %134, %135 : vector<16x1xf32>
    %c2_50 = arith.constant 2 : index
    %c0_51 = arith.constant 0 : index
    %137 = memref.load %arg3[%c2_50, %c0_51] : memref<4x3xf32, #tpu.memory_space<smem>>
    %138 = vector.broadcast %137 : f32 to vector<16x1xf32>
    %139 = arith.mulf %138, %32 : vector<16x1xf32>
    %c2_52 = arith.constant 2 : index
    %c1_53 = arith.constant 1 : index
    %140 = memref.load %arg3[%c2_52, %c1_53] : memref<4x3xf32, #tpu.memory_space<smem>>
    %141 = vector.broadcast %140 : f32 to vector<16x1xf32>
    %142 = arith.mulf %141, %5 : vector<16x1xf32>
    %143 = arith.addf %139, %142 : vector<16x1xf32>
    %c2_54 = arith.constant 2 : index
    %c2_55 = arith.constant 2 : index
    %144 = memref.load %arg3[%c2_54, %c2_55] : memref<4x3xf32, #tpu.memory_space<smem>>
    %145 = vector.broadcast %144 : f32 to vector<16x1xf32>
    %146 = arith.mulf %145, %92 : vector<16x1xf32>
    %147 = arith.addf %143, %146 : vector<16x1xf32>
    %148 = arith.negf %147 : vector<16x1xf32>
    %149 = math.exp %148 : vector<16x1xf32>
    %cst_56 = arith.constant 1.000000e+00 : f32
    %150 = vector.broadcast %cst_56 : f32 to vector<16x1xf32>
    %151 = arith.addf %150, %149 : vector<16x1xf32>
    %152 = arith.divf %150, %151 : vector<16x1xf32>
    %c3 = arith.constant 3 : index
    %c0_57 = arith.constant 0 : index
    %153 = memref.load %arg3[%c3, %c0_57] : memref<4x3xf32, #tpu.memory_space<smem>>
    %154 = vector.broadcast %153 : f32 to vector<16x1xf32>
    %155 = arith.mulf %154, %20 : vector<16x1xf32>
    %c3_58 = arith.constant 3 : index
    %c1_59 = arith.constant 1 : index
    %156 = memref.load %arg3[%c3_58, %c1_59] : memref<4x3xf32, #tpu.memory_space<smem>>
    %157 = vector.broadcast %156 : f32 to vector<16x1xf32>
    %158 = arith.mulf %157, %5 : vector<16x1xf32>
    %159 = arith.addf %155, %158 : vector<16x1xf32>
    %c3_60 = arith.constant 3 : index
    %c2_61 = arith.constant 2 : index
    %160 = memref.load %arg3[%c3_60, %c2_61] : memref<4x3xf32, #tpu.memory_space<smem>>
    %161 = vector.broadcast %160 : f32 to vector<16x1xf32>
    %162 = arith.mulf %161, %104 : vector<16x1xf32>
    %163 = arith.addf %159, %162 : vector<16x1xf32>
    %164 = arith.negf %163 : vector<16x1xf32>
    %165 = math.exp %164 : vector<16x1xf32>
    %cst_62 = arith.constant 1.000000e+00 : f32
    %166 = vector.broadcast %cst_62 : f32 to vector<16x1xf32>
    %167 = arith.addf %166, %165 : vector<16x1xf32>
    %168 = arith.divf %166, %167 : vector<16x1xf32>
    %169 = arith.addf %120, %136 : vector<16x1xf32>
    %170 = arith.addf %152, %168 : vector<16x1xf32>
    %171 = arith.addf %169, %170 : vector<16x1xf32>
    %cst_63 = arith.constant 0.999994993 : f32
    %172 = vector.broadcast %cst_63 : f32 to vector<16x1xf32>
    %173 = arith.mulf %171, %172 : vector<16x1xf32>
    %174 = vector.broadcast %173 : vector<16x1xf32> to vector<16x256xf32>
    %175 = arith.mulf %1, %174 : vector<16x256xf32>
    %cst_64 = arith.constant 0.000000e+00 : f32
    %176 = vector.broadcast %cst_64 : f32 to vector<16x256xf32>
    %177 = arith.maximumf %175, %176 : vector<16x256xf32>
    %178 = vector.shape_cast %177 : vector<16x256xf32> to vector<1x16x256xf32>
    %cst_65 = arith.constant dense<0xFF800000> : vector<1x256xf32>
    %179 = vector.multi_reduction <maximumf>, %178, %cst_65 [1] : vector<1x16x256xf32> to vector<1x256xf32>
    %cst_66 = arith.constant dense<0.000000e+00> : vector<1x256xf32>
    %180 = vector.multi_reduction <add>, %178, %cst_66 [1] : vector<1x16x256xf32> to vector<1x256xf32>
    %cst_67 = arith.constant 1.600000e+01 : f32
    %181 = vector.broadcast %cst_67 : f32 to vector<1x256xf32>
    %182 = arith.divf %180, %181 : vector<1x256xf32>
    %183 = tpu.concatenate %179, %182 in 1 : vector<1x256xf32>, vector<1x256xf32> -> vector<1x512xf32>
    %cst_68 = arith.constant 0.000000e+00 : f32
    %184 = vector.broadcast %cst_68 : f32 to vector<7x512xf32>
    %185 = tpu.concatenate %183, %184 in 0 : vector<1x512xf32>, vector<7x512xf32> -> vector<8x512xf32>
    %c0_69 = arith.constant 0 : index
    %c0_70 = arith.constant 0 : index
    %186 = vector.load %arg2[%c0_69, %c0_70] : memref<512x256xf32, #tpu.memory_space<vmem>>, vector<512x256xf32>
    %cst_71 = arith.constant dense<0.000000e+00> : vector<8x256xf32>
    %187 = tpu.matmul %185, %186, %cst_71 {dimension_numbers = #tpu.dot_dimension_numbers<[1], [0], [0], [1], [0, 0, 1, 1], [], []>} : vector<8x512xf32>, vector<512x256xf32>, vector<8x256xf32> -> vector<8x256xf32>
    %188 = vector.extract_strided_slice %187 {offsets = [0, 0], sizes = [1, 256], strides = [1, 1]} : vector<8x256xf32> to vector<1x256xf32>
    %cst_72 = arith.constant 0.999994993 : f32
    %189 = vector.broadcast %cst_72 : f32 to vector<1x256xf32>
    %190 = arith.mulf %188, %189 : vector<1x256xf32>
    %191 = arith.negf %190 : vector<1x256xf32>
    %192 = math.exp %191 : vector<1x256xf32>
    %cst_73 = arith.constant 1.000000e+00 : f32
    %193 = vector.broadcast %cst_73 : f32 to vector<1x256xf32>
    %194 = arith.addf %193, %192 : vector<1x256xf32>
    %195 = arith.divf %193, %194 : vector<1x256xf32>
    %196 = vector.shape_cast %195 : vector<1x256xf32> to vector<1x1x256xf32>
    %197 = vector.broadcast %196 : vector<1x1x256xf32> to vector<1x16x256xf32>
    %198 = arith.mulf %178, %197 : vector<1x16x256xf32>
    %c0_74 = arith.constant 0 : index
    %c0_75 = arith.constant 0 : index
    %c0_76 = arith.constant 0 : index
    %199 = vector.load %arg4[%c0_74, %c0_75, %c0_76] : memref<1x16x256xf32, #tpu.memory_space<vmem>>, vector<1x16x256xf32>
    tpu.vector_store %arg4[%c0_74, %c0_75, %c0_76], %198 {strides = array<i32>} : memref<1x16x256xf32, #tpu.memory_space<vmem>>, vector<1x16x256xf32>,
    return
  }
  func.func @transform_0(%arg0: i32) -> (i32, i32, i32) {
    %c0_i32 = arith.constant 0 : i32
    %c0_i32_0 = arith.constant 0 : i32
    %c0_i32_1 = arith.constant 0 : i32
    return %arg0, %c0_i32, %c0_i32_0 : i32, i32, i32
  }
  func.func @transform_1(%arg0: i32) -> (i32, i32) {
    %c0_i32 = arith.constant 0 : i32
    %c0_i32_0 = arith.constant 0 : i32
    %c0_i32_1 = arith.constant 0 : i32
    return %c0_i32, %c0_i32_0 : i32, i32
  }
  func.func @transform_2(%arg0: i32) -> (i32, i32) {
    %c0_i32 = arith.constant 0 : i32
    %c0_i32_0 = arith.constant 0 : i32
    %c0_i32_1 = arith.constant 0 : i32
    return %c0_i32, %c0_i32_0 : i32, i32
  }
  func.func @transform_3(%arg0: i32) -> (i32, i32, i32) {
    %c0_i32 = arith.constant 0 : i32
    %c0_i32_0 = arith.constant 0 : i32
    %c0_i32_1 = arith.constant 0 : i32
    return %arg0, %c0_i32, %c0_i32_0 : i32, i32, i32
  }
}

</mosaic_0001>

<llo_original>
// kernel: tpu_custom_call.1
$region0: #{tpu_custom_call.1}
  #allocation0 [shape = 'u32[]', space=smem, size = 0x4, offset = 0x4, fixed_abs, tag = 'smem constant byte address 0x4 - core index']
  #allocation1 [shape = 'u32[144,128]{1,0:T(1,128)}', space=vmem, size = 0x12000, scoped, tag = 'internal scratch']
  %s0 = inlined_call_operand.hbm [shape: f32[2,16,256], index: 0, kind: input, shape index: {}]
  %s1 = inlined_call_operand.hbm [shape: f32[512,256], index: 1, kind: input, shape index: {}]
  %s2 = inlined_call_operand.vmem [shape: f32[4,3], index: 2, kind: input, shape index: {}]
  %s3 = inlined_call_operand.hbm [shape: f32[2,16,256], index: 3, kind: output, shape index: {}]
  %s4 = sld [smem:[#allocation0]]
  $region57: #{tpu_custom_call.1} parent=0
    _
  %s6 = ssub.s32 1, %s4
  %s7 = scalar_select 0, %s6, %s4
  $region1: #{tpu_custom_call.1} parent=0
    #allocation2 [shape = 'u8[32768]{0}', space=vmem, size = 0x8000, scoped, tag = 'input window, operand 0']
    #allocation3 [shape = 's32[2]{0}', space=sflag, size = 0x8, scoped, tag = 'scoped memory for tpu_custom_call.1']
    #allocation4 [shape = 's32[2]{0}', space=sflag, size = 0x8, scoped, tag = 'scoped memory for tpu_custom_call.1']
    #allocation5 [shape = 's32[2]{0}', space=sflag, size = 0x8, scoped, tag = 'scoped memory for tpu_custom_call.1']
    #allocation6 [shape = 'u8[524288]{0}', space=vmem, size = 0x80000, scoped, tag = 'input window, operand 1, single buffered']
    #allocation7 [shape = 's32[1]{0}', space=sflag, size = 0x4, scoped, tag = 'scoped memory for tpu_custom_call.1']
    #allocation8 [shape = 'u8[2048]{0}', space=smem, size = 0x800, scoped, tag = 'input window, operand 2, single buffered']
    #allocation9 [shape = 'u8[32768]{0}', space=vmem, size = 0x8000, scoped, tag = 'output window, operand 0']
    %8 = vsyncpa [#allocation3], 0
    %s9 = scalar_lea.sflag [#allocation3], 1
    %10 = vsyncpa %s9, 0
    %11 = vsyncpa [#allocation7], 0
    %12 = vsyncpa [#allocation5], 0
    %13 = vsyncpa [#allocation4], 0
    %s14 = scalar_lea.sflag [#allocation4], 1
    %15 = vsyncpa %s14, 0
    loop: start=0, step=1, limit=4
    $region2: #{tpu_custom_call.1} parent=1 // loop_pre_header
      _
    $region3: #{tpu_custom_call.1} parent=1 // loop_header
      %s17 = sphi 0, %s21
      %p18 = scmp.ge.s32.totalorder %s17, 4
      %s27 = sphi 0, %s29
      %s30 = sphi 0, %s27
      %s31 = sphi 0, %s30
      %s47 = sphi 0, %s31
      %s51 = sphi 0, %s51
      %s53 = sphi 0, %s51
      %s54 = sphi 0, %s53
      %s68 = sphi 0, %s54
      %s72 = sphi 0, %s72
      %s74 = sphi 0, %s72
      %s75 = sphi 0, %s74
      %s89 = sphi 0, %s75
      %s95 = sphi 0, %s97
      %s98 = sphi 0, %s95
      %s99 = sphi 0, %s98
      %s115 = sphi 0, %s99
    $region4: #{tpu_custom_call.1} parent=1 // loop_header_branch
      %20 = sbr.rel (%p18) target = $region8
    $region5: #{tpu_custom_call.1} parent=1 // loop_body
      %s22 = ssub.s32 %s17, 1
      %s23 = ssub.s32 %s17, 2
      %s24 = sadd.s32 %s17, 1
      %s25 = ssub.s32 %s17, %s24
      %p26 = scmp.eq.s32.totalorder %s25, 0
      %s28 = sadd.s32 %s27, 1
      %s29 = scalar_select %p26, %s27, %s28
      %p32 = pneg %p26
      %p33 = scmp.eq.s32.totalorder %s17, 1
      %p34 = por %p32, %p33
      %p35 = scmp.ne.s32.totalorder %s27, %s30
      %p36 = scmp.eq.s32.totalorder %s17, 0
      %p37 = por %p35, %p36
      %p38 = scmp.ne.s32.totalorder %s27, %s30
      %p39 = scmp.eq.s32.totalorder %s22, 1
      %p40 = por %p38, %p39
      %p41 = scmp.ne.s32.totalorder %s30, %s31
      %p42 = scmp.eq.s32.totalorder %s22, 0
      %p43 = por %p41, %p42
      %p44 = scmp.ne.s32.totalorder %s30, %s31
      %p45 = scmp.eq.s32.totalorder %s23, 1
      %p46 = por %p44, %p45
      %p48 = scmp.ne.s32.totalorder %s31, %s47
      %p49 = scmp.eq.s32.totalorder %s23, 0
      %p50 = por %p48, %p49
      %s52 = sadd.s32 %s51, 1
      %p55 = scmp.eq.s32.totalorder %s17, 1
      %p56 = scmp.ne.s32.totalorder %s51, %s53
      %p57 = scmp.eq.s32.totalorder %s17, 0
      %p58 = por %p56, %p57
      %p59 = scmp.ne.s32.totalorder %s51, %s53
      %p60 = scmp.eq.s32.totalorder %s22, 1
      %p61 = por %p59, %p60
      %p62 = scmp.ne.s32.totalorder %s53, %s54
      %p63 = scmp.eq.s32.totalorder %s22, 0
      %p64 = por %p62, %p63
      %p65 = scmp.ne.s32.totalorder %s53, %s54
      %p66 = scmp.eq.s32.totalorder %s23, 1
      %p67 = por %p65, %p66
      %p69 = scmp.ne.s32.totalorder %s54, %s68
      %p70 = scmp.eq.s32.totalorder %s23, 0
      %p71 = por %p69, %p70
      %s73 = sadd.s32 %s72, 1
      %p76 = scmp.eq.s32.totalorder %s17, 1
      %p77 = scmp.ne.s32.totalorder %s72, %s74
      %p78 = scmp.eq.s32.totalorder %s17, 0
      %p79 = por %p77, %p78
      %p80 = scmp.ne.s32.totalorder %s72, %s74
      %p81 = scmp.eq.s32.totalorder %s22, 1
      %p82 = por %p80, %p81
      %p83 = scmp.ne.s32.totalorder %s74, %s75
      %p84 = scmp.eq.s32.totalorder %s22, 0
      %p85 = por %p83, %p84
      %p86 = scmp.ne.s32.totalorder %s74, %s75
      %p87 = scmp.eq.s32.totalorder %s23, 1
      %p88 = por %p86, %p87
      %p90 = scmp.ne.s32.totalorder %s75, %s89
      %p91 = scmp.eq.s32.totalorder %s23, 0
      %p92 = por %p90, %p91
      %s93 = ssub.s32 %s17, %s24
      %p94 = scmp.eq.s32.totalorder %s93, 0
      %s96 = sadd.s32 %s95, 1
      %s97 = scalar_select %p94, %s95, %s96
      %p100 = pneg %p94
      %p101 = scmp.eq.s32.totalorder %s17, 1
      %p102 = por %p100, %p101
      %p103 = scmp.ne.s32.totalorder %s95, %s98
      %p104 = scmp.eq.s32.totalorder %s17, 0
      %p105 = por %p103, %p104
      %p106 = scmp.ne.s32.totalorder %s95, %s98
      %p107 = scmp.eq.s32.totalorder %s22, 1
      %p108 = por %p106, %p107
      %p109 = scmp.ne.s32.totalorder %s98, %s99
      %p110 = scmp.eq.s32.totalorder %s22, 0
      %p111 = por %p109, %p110
      %p112 = scmp.ne.s32.totalorder %s98, %s99
      %p113 = scmp.eq.s32.totalorder %s23, 1
      %p114 = por %p112, %p113
      %p116 = scmp.ne.s32.totalorder %s99, %s115
      %p117 = scmp.eq.s32.totalorder %s23, 0
      %p118 = por %p116, %p117
      %p119 = scmp.le.s32.totalorder 1, %s17
      %p120 = scmp.lt.s32.totalorder %s17, 3
      %p121 = pnand %p119, %p120
      %p122 = pneg %p121
      // Predicated region
      $region9: #{tpu_custom_call.1} parent=5 // pred_check
        _
      $region10: #{tpu_custom_call.1} parent=5 // pred_check_branch
        %124 = sbr.rel (%p121) target = $region12
      $region11: #{tpu_custom_call.1} parent=5 // pred_region
        %s125 = ssub.s32 %s17, 1
        // Predicated region
        $region13: #{tpu_custom_call.1} parent=11 // pred_check
          %p126 = pneg %p64
        $region14: #{tpu_custom_call.1} parent=11 // pred_check_branch
          %128 = sbr.rel (%p126) target = $region16
        $region15: #{tpu_custom_call.1} parent=11 // pred_region
          %s130 = ssub.s32 16384, 16384
          %131 = vsyncadd [#allocation7], %s130
          %s132 = sshll.u32 [#allocation6], 4
          %s133 = int_to_ptr.vmem [resolvable:$true] %s132
          %138 = dma.hbm_to_vmem [thread:$0]  %s1, 16384, %s133, [#allocation7], 256, 256, 16
        $region16: #{tpu_custom_call.1} parent=11 // pred_fallthru
          _
        // Predicated region
        $region17: #{tpu_custom_call.1} parent=11 // pred_check
          %p139 = pneg %p85
        $region18: #{tpu_custom_call.1} parent=11 // pred_check_branch
          %141 = sbr.rel (%p139) target = $region20
        $region19: #{tpu_custom_call.1} parent=11 // pred_region
          %s143 = ssub.s32 64, 64
          %144 = vsyncadd [#allocation5], %s143
          %s146 = sshll.u32 %s2, 4
          %s147 = int_to_ptr.vmem [resolvable:$true] %s146
          %149 = dma.vmem_to_smem %s147, 64, [#allocation8], [#allocation5]
        $region20: #{tpu_custom_call.1} parent=11 // pred_fallthru
          _
      $region12: #{tpu_custom_call.1} parent=5 // pred_fallthru
        _
      %p150 = scmp.lt.s32.totalorder %s17, 2
      // Predicated region
      $region21: #{tpu_custom_call.1} parent=5 // pred_check
        %p151 = pneg %p150
      $region22: #{tpu_custom_call.1} parent=5 // pred_check_branch
        %153 = sbr.rel (%p151) target = $region24
      $region23: #{tpu_custom_call.1} parent=5 // pred_region
        // Predicated region
        $region25: #{tpu_custom_call.1} parent=23 // pred_check
          %p154 = pneg %p37
        $region26: #{tpu_custom_call.1} parent=23 // pred_check_branch
          %156 = sbr.rel (%p154) target = $region28
        $region27: #{tpu_custom_call.1} parent=23 // pred_region
          %s157 = sand.u32 %s27, 1
          %s158 = scalar_lea.sflag [#allocation3], %s157
          %s159 = sand.u32 %s27, 1
          %s160 = smul.addr %s159, 32
          %s161 = scalar_lea.vmem [#allocation2], %s160
          %s163 = ssub.s32 512, 512
          %164 = vsyncadd %s158, %s163
          %s165 = smul.addr %s17, 4
          %s166 = smul.addr %s165, 128
          %s167 = scalar_lea.hbm %s0, %s166
          %s168 = sshll.u32 %s161, 4
          %s169 = int_to_ptr.vmem [resolvable:$true] %s168
          %174 = dma.hbm_to_vmem [thread:$0]  %s167, 512, %s169, %s158, 256, 256, 16
        $region28: #{tpu_custom_call.1} parent=23 // pred_fallthru
          _
      $region24: #{tpu_custom_call.1} parent=5 // pred_fallthru
        _
      %p175 = scmp.le.s32.totalorder 1, %s17
      %p176 = scmp.lt.s32.totalorder %s17, 3
      %p177 = pnand %p175, %p176
      %p178 = pneg %p177
      // Predicated region
      $region29: #{tpu_custom_call.1} parent=5 // pred_check
        _
      $region30: #{tpu_custom_call.1} parent=5 // pred_check_branch
        %180 = sbr.rel (%p177) target = $region32
      $region31: #{tpu_custom_call.1} parent=5 // pred_region
        %s181 = ssub.s32 %s17, 1
        %s182 = sand.u32 %s30, 1
        %s183 = scalar_lea.sflag [#allocation3], %s182
        %s184 = sand.u32 %s30, 1
        %s185 = smul.addr %s184, 32
        %s186 = scalar_lea.vmem [#allocation2], %s185
        // Predicated region
        $region33: #{tpu_custom_call.1} parent=31 // pred_check
          %p187 = pneg %p43
        $region34: #{tpu_custom_call.1} parent=31 // pred_check_branch
          %189 = sbr.rel (%p187) target = $region36
        $region35: #{tpu_custom_call.1} parent=31 // pred_region
          %190 = dma.done %s183, 512
        $region36: #{tpu_custom_call.1} parent=31 // pred_fallthru
          _
        // Predicated region
        $region37: #{tpu_custom_call.1} parent=31 // pred_check
          %p191 = pneg %p64
        $region38: #{tpu_custom_call.1} parent=31 // pred_check_branch
          %193 = sbr.rel (%p191) target = $region40
        $region39: #{tpu_custom_call.1} parent=31 // pred_region
          %194 = dma.done [#allocation7], 16384
        $region40: #{tpu_custom_call.1} parent=31 // pred_fallthru
          _
        // Predicated region
        $region41: #{tpu_custom_call.1} parent=31 // pred_check
          %p195 = pneg %p85
        $region42: #{tpu_custom_call.1} parent=31 // pred_check_branch
          %197 = sbr.rel (%p195) target = $region44
        $region43: #{tpu_custom_call.1} parent=31 // pred_region
          %198 = dma.done [#allocation5], 64
        $region44: #{tpu_custom_call.1} parent=31 // pred_fallthru
          _
        %199 = sfence
        %s200 = sand.u32 %s30, 1
        %s201 = scalar_lea.sflag [#allocation3], %s200
        %s202 = sand.u32 %s30, 1
        %s203 = smul.addr %s202, 32
        %s204 = scalar_lea.vmem [#allocation2], %s203
        %p205 = pneg %p43
        %p206 = pneg %p40
        %p207 = pneg %p64
        %p208 = pneg %p61
        %p209 = pneg %p85
        %p210 = pneg %p82
        %p211 = pneg %p111
        %p212 = pneg %p108
        %s213 = sand.u32 %s98, 1
        %s214 = scalar_lea.sflag [#allocation4], %s213
        %s215 = sand.u32 %s98, 1
        %s216 = smul.addr %s215, 32
        %s217 = scalar_lea.vmem [#allocation9], %s216
        %v218 = vld [vmem:[%s186] sm:$0xff]
        %v219 = vld [vmem:[%s186 + $0x8] sm:$0xff]
        %v220 = vld [vmem:[%s186 + $0x10] sm:$0xff]
        %v221 = vld [vmem:[%s186 + $0x18] sm:$0xff]
        %v222 = vadd.f32 %v218, %v219
        %223 = vadd.xlane.f32.xlu0 %v222
        %v224 = vpop.xlane.xlu0 %223
        %v225 = vadd.f32 %v220, %v221
        %226 = vadd.xlane.f32.xlu0 %v225
        %v227 = vpop.xlane.xlu0 %226
        %v228 = vrcp.pop 256.0
        %v229 = vmul.f32 %v224, %v228
        %v230 = vmul.f32 %v227, %v228
        %v231 = vlaneseq
        %v232 = vshrl.u32 %v231, 7
        %v233 = vadd.s32 %v232, 8
        %vm234 = vcmp.lt.s32.totalorder %v232, 0
        %v235 = vsub.s32 0, %v232
        %v236 = vsel %vm234, %v235, %v232
        %v237 = vshrl.u32 %v236, 4
        %v238 = vand.u32 %v236, 15
        %v239 = vsub.s32 0, %v238
        %v240 = vsel %vm234, %v239, %v238
        %vm241 = vcmp.lt.s32.totalorder %v233, 0
        %v242 = vsub.s32 0, %v233
        %v243 = vsel %vm241, %v242, %v233
        %v244 = vshrl.u32 %v243, 4
        %v245 = vand.u32 %v243, 15
        %v246 = vsub.s32 0, %v245
        %v247 = vsel %vm241, %v246, %v245
        %v248 = vrot.slane %v229, 4
        %v249 = vrot.slane %v230, 4
        %vm250 = vcmp.lt.s32.totalorder %v232, 4
        %v251 = vsel %vm250, %v248, %v249
        %v252 = vsel %vm250, %v249, %v248
        %v253 = vadd.s32 %v240, 4294967292
        %v254 = vadd.s32 %v247, 4294967292
        %vm255 = vcmp.ge.s32.totalorder %v253, 0
        %vm256 = vcmp.ge.s32.totalorder %v254, 0
        %vm257 = vcmp.lt.s32.totalorder %v253, 16
        %vm258 = vcmp.lt.s32.totalorder %v254, 16
        %vm259 = vmand %vm255, %vm257
        %vm260 = vmand %vm256, %vm258
        %v261 = vsel %vm259, %v252, 0.0
        %v262 = vsel %vm260, %v251, 0.0
        %v263 = vrot.slane %v229, 5
        %v264 = vrot.slane %v230, 5
        %vm265 = vcmp.lt.s32.totalorder %v232, 3
        %v266 = vsel %vm265, %v263, %v264
        %v267 = vsel %vm265, %v264, %v263
        %v268 = vadd.s32 %v240, 4294967293
        %v269 = vadd.s32 %v247, 4294967293
        %vm270 = vcmp.ge.s32.totalorder %v268, 0
        %vm271 = vcmp.ge.s32.totalorder %v269, 0
        %vm272 = vcmp.lt.s32.totalorder %v268, 16
        %vm273 = vcmp.lt.s32.totalorder %v269, 16
        %vm274 = vmand %vm270, %vm272
        %vm275 = vmand %vm271, %vm273
        %v276 = vsel %vm274, %v267, 0.0
        %v277 = vsel %vm275, %v266, 0.0
        %v278 = vrot.slane %v229, 6
        %v279 = vrot.slane %v230, 6
        %vm280 = vcmp.lt.s32.totalorder %v232, 2
        %v281 = vsel %vm280, %v278, %v279
        %v282 = vsel %vm280, %v279, %v278
        %v283 = vadd.s32 %v240, 4294967294
        %v284 = vadd.s32 %v247, 4294967294
        %vm285 = vcmp.ge.s32.totalorder %v283, 0
        %vm286 = vcmp.ge.s32.totalorder %v284, 0
        %vm287 = vcmp.lt.s32.totalorder %v283, 16
        %vm288 = vcmp.lt.s32.totalorder %v284, 16
        %vm289 = vmand %vm285, %vm287
        %vm290 = vmand %vm286, %vm288
        %v291 = vsel %vm289, %v282, 0.0
        %v292 = vsel %vm290, %v281, 0.0
        %v293 = vrot.slane %v229, 7
        %v294 = vrot.slane %v230, 7
        %vm295 = vcmp.lt.s32.totalorder %v232, 1
        %v296 = vsel %vm295, %v293, %v294
        %v297 = vsel %vm295, %v294, %v293
        %v298 = vadd.s32 %v240, 4294967295
        %v299 = vadd.s32 %v247, 4294967295
        %vm300 = vcmp.ge.s32.totalorder %v298, 0
        %vm301 = vcmp.ge.s32.totalorder %v299, 0
        %vm302 = vcmp.lt.s32.totalorder %v298, 16
        %vm303 = vcmp.lt.s32.totalorder %v299, 16
        %vm304 = vmand %vm300, %vm302
        %vm305 = vmand %vm301, %vm303
        %v306 = vsel %vm304, %v297, 0.0
        %v307 = vsel %vm305, %v296, 0.0
        %v308 = vrot.slane %v229, 1
        %v309 = vrot.slane %v230, 1
        %vm310 = vcmp.lt.s32.totalorder %v232, 7
        %v311 = vsel %vm310, %v308, %v309
        %v312 = vsel %vm310, %v309, %v308
        %v313 = vadd.s32 %v240, 1
        %v314 = vadd.s32 %v247, 1
        %vm315 = vcmp.ge.s32.totalorder %v313, 0
        %vm316 = vcmp.ge.s32.totalorder %v314, 0
        %vm317 = vcmp.lt.s32.totalorder %v313, 16
        %vm318 = vcmp.lt.s32.totalorder %v314, 16
        %vm319 = vmand %vm315, %vm317
        %vm320 = vmand %vm316, %vm318
        %v321 = vsel %vm319, %v311, 0.0
        %v322 = vsel %vm320, %v312, 0.0
        %v323 = vrot.slane %v229, 2
        %v324 = vrot.slane %v230, 2
        %vm325 = vcmp.lt.s32.totalorder %v232, 6
        %v326 = vsel %vm325, %v323, %v324
        %v327 = vsel %vm325, %v324, %v323
        %v328 = vadd.s32 %v240, 2
        %v329 = vadd.s32 %v247, 2
        %vm330 = vcmp.ge.s32.totalorder %v328, 0
        %vm331 = vcmp.ge.s32.totalorder %v329, 0
        %vm332 = vcmp.lt.s32.totalorder %v328, 16
        %vm333 = vcmp.lt.s32.totalorder %v329, 16
        %vm334 = vmand %vm330, %vm332
        %vm335 = vmand %vm331, %vm333
        %v336 = vsel %vm334, %v326, 0.0
        %v337 = vsel %vm335, %v327, 0.0
        %v338 = vrot.slane %v229, 3
        %v339 = vrot.slane %v230, 3
        %vm340 = vcmp.lt.s32.totalorder %v232, 5
        %v341 = vsel %vm340, %v338, %v339
        %v342 = vsel %vm340, %v339, %v338
        %v343 = vadd.s32 %v240, 3
        %v344 = vadd.s32 %v247, 3
        %vm345 = vcmp.ge.s32.totalorder %v343, 0
        %vm346 = vcmp.ge.s32.totalorder %v344, 0
        %vm347 = vcmp.lt.s32.totalorder %v343, 16
        %vm348 = vcmp.lt.s32.totalorder %v344, 16
        %vm349 = vmand %vm345, %vm347
        %vm350 = vmand %vm346, %vm348
        %v351 = vsel %vm349, %v341, 0.0
        %v352 = vsel %vm350, %v342, 0.0
        %v353 = vadd.s32 %v240, 4
        %v354 = vadd.s32 %v247, 4
        %vm355 = vcmp.ge.s32.totalorder %v353, 0
        %vm356 = vcmp.ge.s32.totalorder %v354, 0
        %vm357 = vcmp.lt.s32.totalorder %v353, 16
        %vm358 = vcmp.lt.s32.totalorder %v354, 16
        %vm359 = vmand %vm355, %vm357
        %vm360 = vmand %vm356, %vm358
        %v361 = vsel %vm359, %v251, 0.0
        %v362 = vsel %vm360, %v252, 0.0
        %s363 = sld [smem:[#allocation8]]
        %v364 = vstv %s363
        %v365 = vmul.f32 %v364, %v306
        %v366 = vmul.f32 %v364, %v307
        %s367 = sld [smem:[#allocation8 + $0x1]]
        %v368 = vstv %s367
        %v369 = vmul.f32 %v368, %v229
        %v370 = vmul.f32 %v368, %v230
        %v371 = vadd.f32 %v365, %v369
        %v372 = vadd.f32 %v366, %v370
        %s373 = sld [smem:[#allocation8 + $0x2]]
        %v374 = vstv %s373
        %v375 = vmul.f32 %v374, %v321
        %v376 = vmul.f32 %v374, %v322
        %v377 = vadd.f32 %v371, %v375
        %v378 = vadd.f32 %v372, %v376
        %v379 = vxor.u32 %v377, 2147483648
        %v380 = vxor.u32 %v378, 2147483648
        %v381 = vmul.f32 %v379, 1.442695
        %v382 = vpow.pop %v381
        %v383 = vmul.f32 %v380, 1.442695
        %v384 = vpow.pop %v383
        %v385 = vadd.f32 %v382, 1.0
        %v386 = vadd.f32 %v384, 1.0
        %v387 = vrcp.pop %v385
        %v388 = vmul.f32 1.0, %v387
        %v389 = vrcp.pop %v386
        %v390 = vmul.f32 1.0, %v389
        %s391 = sld [smem:[#allocation8 + $0x80]]
        %v392 = vstv %s391
        %v393 = vmul.f32 %v392, %v291
        %v394 = vmul.f32 %v392, %v292
        %s395 = sld [smem:[#allocation8 + $0x81]]
        %v396 = vstv %s395
        %v397 = vmul.f32 %v396, %v229
        %v398 = vmul.f32 %v396, %v230
        %v399 = vadd.f32 %v393, %v397
        %v400 = vadd.f32 %v394, %v398
        %s401 = sld [smem:[#allocation8 + $0x82]]
        %v402 = vstv %s401
        %v403 = vmul.f32 %v402, %v336
        %v404 = vmul.f32 %v402, %v337
        %v405 = vadd.f32 %v399, %v403
        %v406 = vadd.f32 %v400, %v404
        %v407 = vxor.u32 %v405, 2147483648
        %v408 = vxor.u32 %v406, 2147483648
        %v409 = vmul.f32 %v407, 1.442695
        %v410 = vpow.pop %v409
        %v411 = vmul.f32 %v408, 1.442695
        %v412 = vpow.pop %v411
        %v413 = vadd.f32 %v410, 1.0
        %v414 = vadd.f32 %v412, 1.0
        %v415 = vrcp.pop %v413
        %v416 = vmul.f32 1.0, %v415
        %v417 = vrcp.pop %v414
        %v418 = vmul.f32 1.0, %v417
        %s419 = sld [smem:[#allocation8 + $0x100]]
        %v420 = vstv %s419
        %v421 = vmul.f32 %v420, %v276
        %v422 = vmul.f32 %v420, %v277
        %s423 = sld [smem:[#allocation8 + $0x101]]
        %v424 = vstv %s423
        %v425 = vmul.f32 %v424, %v229
        %v426 = vmul.f32 %v424, %v230
        %v427 = vadd.f32 %v421, %v425
        %v428 = vadd.f32 %v422, %v426
        %s429 = sld [smem:[#allocation8 + $0x102]]
        %v430 = vstv %s429
        %v431 = vmul.f32 %v430, %v351
        %v432 = vmul.f32 %v430, %v352
        %v433 = vadd.f32 %v427, %v431
        %v434 = vadd.f32 %v428, %v432
        %v435 = vxor.u32 %v433, 2147483648
        %v436 = vxor.u32 %v434, 2147483648
        %v437 = vmul.f32 %v435, 1.442695
        %v438 = vpow.pop %v437
        %v439 = vmul.f32 %v436, 1.442695
        %v440 = vpow.pop %v439
        %v441 = vadd.f32 %v438, 1.0
        %v442 = vadd.f32 %v440, 1.0
        %v443 = vrcp.pop %v441
        %v444 = vmul.f32 1.0, %v443
        %v445 = vrcp.pop %v442
        %v446 = vmul.f32 1.0, %v445
        %s447 = sld [smem:[#allocation8 + $0x180]]
        %v448 = vstv %s447
        %v449 = vmul.f32 %v448, %v261
        %v450 = vmul.f32 %v448, %v262
        %s451 = sld [smem:[#allocation8 + $0x181]]
        %v452 = vstv %s451
        %v453 = vmul.f32 %v452, %v229
        %v454 = vmul.f32 %v452, %v230
        %v455 = vadd.f32 %v449, %v453
        %v456 = vadd.f32 %v450, %v454
        %s457 = sld [smem:[#allocation8 + $0x182]]
        %v458 = vstv %s457
        %v459 = vmul.f32 %v458, %v361
        %v460 = vmul.f32 %v458, %v362
        %v461 = vadd.f32 %v455, %v459
        %v462 = vadd.f32 %v456, %v460
        %v463 = vxor.u32 %v461, 2147483648
        %v464 = vxor.u32 %v462, 2147483648
        %v465 = vmul.f32 %v463, 1.442695
        %v466 = vpow.pop %v465
        %v467 = vmul.f32 %v464, 1.442695
        %v468 = vpow.pop %v467
        %v469 = vadd.f32 %v466, 1.0
        %v470 = vadd.f32 %v468, 1.0
        %v471 = vrcp.pop %v469
        %v472 = vmul.f32 1.0, %v471
        %v473 = vrcp.pop %v470
        %v474 = vmul.f32 1.0, %v473
        %v475 = vadd.f32 %v388, %v416
        %v476 = vadd.f32 %v390, %v418
        %v477 = vadd.f32 %v444, %v472
        %v478 = vadd.f32 %v446, %v474
        %v479 = vadd.f32 %v475, %v477
        %v480 = vadd.f32 %v476, %v478
        %v481 = vmul.f32 %v479, 0.999995
        %v482 = vmul.f32 %v480, 0.999995
        %484 = vset.pattern.permute.xlu0 0
        %485 = vperm.xlu0 %484, %v481
        %v486 = vpop.permute.xlu0 %485
        %489 = vset.pattern.permute.xlu0 0
        %490 = vperm.xlu0 %489, %v482
        %v491 = vpop.permute.xlu0 %490
        %v493 = vmul.f32 %v218, %v486
        %v494 = vmul.f32 %v219, %v486
        %v495 = vmul.f32 %v220, %v491
        %v496 = vmul.f32 %v221, %v491
        %v497 = vmax.f32 %v493, 0.0
        %v498 = vmax.f32 %v494, 0.0
        %v499 = vmax.f32 %v495, 0.0
        %v500 = vmax.f32 %v496, 0.0
        %v501 = vmax.f32 %v497, %v499
        %v502 = vrot.slane %v501, 4
        %v503 = vmax.f32 %v501, %v502
        %v504 = vrot.slane %v503, 2
        %v505 = vmax.f32 %v503, %v504
        %v506 = vrot.slane %v505, 1
        %v507 = vmax.f32 %v505, %v506
        %v508 = vmax.f32 %v498, %v500
        %v509 = vrot.slane %v508, 4
        %v510 = vmax.f32 %v508, %v509
        %v511 = vrot.slane %v510, 2
        %v512 = vmax.f32 %v510, %v511
        %v513 = vrot.slane %v512, 1
        %v514 = vmax.f32 %v512, %v513
        %v515 = vadd.f32 %v497, %v499
        %v516 = vrot.slane %v515, 4
        %v517 = vadd.f32 %v515, %v516
        %v518 = vrot.slane %v517, 2
        %v519 = vadd.f32 %v517, %v518
        %v520 = vrot.slane %v519, 1
        %v521 = vadd.f32 %v519, %v520
        %v522 = vadd.f32 %v498, %v500
        %v523 = vrot.slane %v522, 4
        %v524 = vadd.f32 %v522, %v523
        %v525 = vrot.slane %v524, 2
        %v526 = vadd.f32 %v524, %v525
        %v527 = vrot.slane %v526, 1
        %v528 = vadd.f32 %v526, %v527
        %v529 = vrcp.pop 16.0
        %v530 = vmul.f32 %v521, %v529
        %v531 = vmul.f32 %v528, %v529
        %vm532 = vcmask 1040384
        %v533 = vsel %vm532, %v507, 0.0
        %v534 = vsel %vm532, %v514, 0.0
        %v535 = vsel %vm532, %v530, 0.0
        %v536 = vsel %vm532, %v531, 0.0
        %v537 = vld [vmem:[#allocation6] sm:$0xff]
        %v538 = vld [vmem:[#allocation6 + $0x8] sm:$0xff]
        %v539 = vld [vmem:[#allocation6 + $0x10] sm:$0xff]
        %v540 = vld [vmem:[#allocation6 + $0x18] sm:$0xff]
        %v541 = vld [vmem:[#allocation6 + $0x20] sm:$0xff]
        %v542 = vld [vmem:[#allocation6 + $0x28] sm:$0xff]
        %v543 = vld [vmem:[#allocation6 + $0x30] sm:$0xff]
        %v544 = vld [vmem:[#allocation6 + $0x38] sm:$0xff]
        %v545 = vld [vmem:[#allocation6 + $0x40] sm:$0xff]
        %v546 = vld [vmem:[#allocation6 + $0x48] sm:$0xff]
        %v547 = vld [vmem:[#allocation6 + $0x50] sm:$0xff]
        %v548 = vld [vmem:[#allocation6 + $0x58] sm:$0xff]
        %v549 = vld [vmem:[#allocation6 + $0x60] sm:$0xff]
        %v550 = vld [vmem:[#allocation6 + $0x68] sm:$0xff]
        %v551 = vld [vmem:[#allocation6 + $0x70] sm:$0xff]
        %v552 = vld [vmem:[#allocation6 + $0x78] sm:$0xff]
        %v553 = vld [vmem:[#allocation6 + $0x80] sm:$0xff]
        %v554 = vld [vmem:[#allocation6 + $0x88] sm:$0xff]
        %v555 = vld [vmem:[#allocation6 + $0x90] sm:$0xff]
        %v556 = vld [vmem:[#allocation6 + $0x98] sm:$0xff]
        %v557 = vld [vmem:[#allocation6 + $0xa0] sm:$0xff]
        %v558 = vld [vmem:[#allocation6 + $0xa8] sm:$0xff]
        %v559 = vld [vmem:[#allocation6 + $0xb0] sm:$0xff]
        %v560 = vld [vmem:[#allocation6 + $0xb8] sm:$0xff]
        %v561 = vld [vmem:[#allocation6 + $0xc0] sm:$0xff]
        %v562 = vld [vmem:[#allocation6 + $0xc8] sm:$0xff]
        %v563 = vld [vmem:[#allocation6 + $0xd0] sm:$0xff]
        %v564 = vld [vmem:[#allocation6 + $0xd8] sm:$0xff]
        %v565 = vld [vmem:[#allocation6 + $0xe0] sm:$0xff]
        %v566 = vld [vmem:[#allocation6 + $0xe8] sm:$0xff]
        %v567 = vld [vmem:[#allocation6 + $0xf0] sm:$0xff]
        %v568 = vld [vmem:[#allocation6 + $0xf8] sm:$0xff]
        %v569 = vld [vmem:[#allocation6 + $0x100] sm:$0xff]
        %v570 = vld [vmem:[#allocation6 + $0x108] sm:$0xff]
        %v571 = vld [vmem:[#allocation6 + $0x110] sm:$0xff]
        %v572 = vld [vmem:[#allocation6 + $0x118] sm:$0xff]
        %v573 = vld [vmem:[#allocation6 + $0x120] sm:$0xff]
        %v574 = vld [vmem:[#allocation6 + $0x128] sm:$0xff]
        %v575 = vld [vmem:[#allocation6 + $0x130] sm:$0xff]
        %v576 = vld [vmem:[#allocation6 + $0x138] sm:$0xff]
        %v577 = vld [vmem:[#allocation6 + $0x140] sm:$0xff]
        %v578 = vld [vmem:[#allocation6 + $0x148] sm:$0xff]
        %v579 = vld [vmem:[#allocation6 + $0x150] sm:$0xff]
        %v580 = vld [vmem:[#allocation6 + $0x158] sm:$0xff]
        %v581 = vld [vmem:[#allocation6 + $0x160] sm:$0xff]
        %v582 = vld [vmem:[#allocation6 + $0x168] sm:$0xff]
        %v583 = vld [vmem:[#allocation6 + $0x170] sm:$0xff]
        %v584 = vld [vmem:[#allocation6 + $0x178] sm:$0xff]
        %v585 = vld [vmem:[#allocation6 + $0x180] sm:$0xff]
        %v586 = vld [vmem:[#allocation6 + $0x188] sm:$0xff]
        %v587 = vld [vmem:[#allocation6 + $0x190] sm:$0xff]
        %v588 = vld [vmem:[#allocation6 + $0x198] sm:$0xff]
        %v589 = vld [vmem:[#allocation6 + $0x1a0] sm:$0xff]
        %v590 = vld [vmem:[#allocation6 + $0x1a8] sm:$0xff]
        %v591 = vld [vmem:[#allocation6 + $0x1b0] sm:$0xff]
        %v592 = vld [vmem:[#allocation6 + $0x1b8] sm:$0xff]
        %v593 = vld [vmem:[#allocation6 + $0x1c0] sm:$0xff]
        %v594 = vld [vmem:[#allocation6 + $0x1c8] sm:$0xff]
        %v595 = vld [vmem:[#allocation6 + $0x1d0] sm:$0xff]
        %v596 = vld [vmem:[#allocation6 + $0x1d8] sm:$0xff]
        %v597 = vld [vmem:[#allocation6 + $0x1e0] sm:$0xff]
        %v598 = vld [vmem:[#allocation6 + $0x1e8] sm:$0xff]
        %v599 = vld [vmem:[#allocation6 + $0x1f0] sm:$0xff]
        %v600 = vld [vmem:[#allocation6 + $0x1f8] sm:$0xff]
        %v601 = vld [vmem:[#allocation6 + $0x200] sm:$0xff]
        %v602 = vld [vmem:[#allocation6 + $0x208] sm:$0xff]
        %v603 = vld [vmem:[#allocation6 + $0x210] sm:$0xff]
        %v604 = vld [vmem:[#allocation6 + $0x218] sm:$0xff]
        %v605 = vld [vmem:[#allocation6 + $0x220] sm:$0xff]
        %v606 = vld [vmem:[#allocation6 + $0x228] sm:$0xff]
        %v607 = vld [vmem:[#allocation6 + $0x230] sm:$0xff]
        %v608 = vld [vmem:[#allocation6 + $0x238] sm:$0xff]
        %v609 = vld [vmem:[#allocation6 + $0x240] sm:$0xff]
        %v610 = vld [vmem:[#allocation6 + $0x248] sm:$0xff]
        %v611 = vld [vmem:[#allocation6 + $0x250] sm:$0xff]
        %v612 = vld [vmem:[#allocation6 + $0x258] sm:$0xff]
        %v613 = vld [vmem:[#allocation6 + $0x260] sm:$0xff]
        %v614 = vld [vmem:[#allocation6 + $0x268] sm:$0xff]
        %v615 = vld [vmem:[#allocation6 + $0x270] sm:$0xff]
        %v616 = vld [vmem:[#allocation6 + $0x278] sm:$0xff]
        %v617 = vld [vmem:[#allocation6 + $0x280] sm:$0xff]
        %v618 = vld [vmem:[#allocation6 + $0x288] sm:$0xff]
        %v619 = vld [vmem:[#allocation6 + $0x290] sm:$0xff]
        %v620 = vld [vmem:[#allocation6 + $0x298] sm:$0xff]
        %v621 = vld [vmem:[#allocation6 + $0x2a0] sm:$0xff]
        %v622 = vld [vmem:[#allocation6 + $0x2a8] sm:$0xff]
        %v623 = vld [vmem:[#allocation6 + $0x2b0] sm:$0xff]
        %v624 = vld [vmem:[#allocation6 + $0x2b8] sm:$0xff]
        %v625 = vld [vmem:[#allocation6 + $0x2c0] sm:$0xff]
        %v626 = vld [vmem:[#allocation6 + $0x2c8] sm:$0xff]
        %v627 = vld [vmem:[#allocation6 + $0x2d0] sm:$0xff]
        %v628 = vld [vmem:[#allocation6 + $0x2d8] sm:$0xff]
        %v629 = vld [vmem:[#allocation6 + $0x2e0] sm:$0xff]
        %v630 = vld [vmem:[#allocation6 + $0x2e8] sm:$0xff]
        %v631 = vld [vmem:[#allocation6 + $0x2f0] sm:$0xff]
        %v632 = vld [vmem:[#allocation6 + $0x2f8] sm:$0xff]
        %v633 = vld [vmem:[#allocation6 + $0x300] sm:$0xff]
        %v634 = vld [vmem:[#allocation6 + $0x308] sm:$0xff]
        %v635 = vld [vmem:[#allocation6 + $0x310] sm:$0xff]
        %v636 = vld [vmem:[#allocation6 + $0x318] sm:$0xff]
        %v637 = vld [vmem:[#allocation6 + $0x320] sm:$0xff]
        %v638 = vld [vmem:[#allocation6 + $0x328] sm:$0xff]
        %v639 = vld [vmem:[#allocation6 + $0x330] sm:$0xff]
        %v640 = vld [vmem:[#allocation6 + $0x338] sm:$0xff]
        %v641 = vld [vmem:[#allocation6 + $0x340] sm:$0xff]
        %v642 = vld [vmem:[#allocation6 + $0x348] sm:$0xff]
        %v643 = vld [vmem:[#allocation6 + $0x350] sm:$0xff]
        %v644 = vld [vmem:[#allocation6 + $0x358] sm:$0xff]
        %v645 = vld [vmem:[#allocation6 + $0x360] sm:$0xff]
        %v646 = vld [vmem:[#allocation6 + $0x368] sm:$0xff]
        %v647 = vld [vmem:[#allocation6 + $0x370] sm:$0xff]
        %v648 = vld [vmem:[#allocation6 + $0x378] sm:$0xff]
        %v649 = vld [vmem:[#allocation6 + $0x380] sm:$0xff]
        %v650 = vld [vmem:[#allocation6 + $0x388] sm:$0xff]
        %v651 = vld [vmem:[#allocation6 + $0x390] sm:$0xff]
        %v652 = vld [vmem:[#allocation6 + $0x398] sm:$0xff]
        %v653 = vld [vmem:[#allocation6 + $0x3a0] sm:$0xff]
        %v654 = vld [vmem:[#allocation6 + $0x3a8] sm:$0xff]
        %v655 = vld [vmem:[#allocation6 + $0x3b0] sm:$0xff]
        %v656 = vld [vmem:[#allocation6 + $0x3b8] sm:$0xff]
        %v657 = vld [vmem:[#allocation6 + $0x3c0] sm:$0xff]
        %v658 = vld [vmem:[#allocation6 + $0x3c8] sm:$0xff]
        %v659 = vld [vmem:[#allocation6 + $0x3d0] sm:$0xff]
        %v660 = vld [vmem:[#allocation6 + $0x3d8] sm:$0xff]
        %v661 = vld [vmem:[#allocation6 + $0x3e0] sm:$0xff]
        %v662 = vld [vmem:[#allocation6 + $0x3e8] sm:$0xff]
        %v663 = vld [vmem:[#allocation6 + $0x3f0] sm:$0xff]
        %v664 = vld [vmem:[#allocation6 + $0x3f8] sm:$0xff]
        %665 = vmatprep.subr.mxu0 %v538
        %666 = vmatpush1.msra.mxu0 %v537
        %667 = vmatprep.subr.mxu0 %v540
        %668 = vmatpush1.msra.mxu0 %v539
        %669 = vmatprep.subr.mxu0 %v542
        %670 = vmatpush1.msra.mxu0 %v541
        %671 = vmatprep.subr.mxu0 %v544
        %672 = vmatpush1.msra.mxu0 %v543
        %673 = vmatprep.subr.mxu0 %v546
        %674 = vmatpush1.msra.mxu0 %v545
        %675 = vmatprep.subr.mxu0 %v548
        %676 = vmatpush1.msra.mxu0 %v547
        %677 = vmatprep.subr.mxu0 %v550
        %678 = vmatpush1.msra.mxu0 %v549
        %679 = vmatprep.subr.mxu0 %v552
        %680 = vmatpush1.msra.mxu0 %v551
        %681 = vmatprep.subr.mxu0 %v554
        %682 = vmatpush1.msra.mxu0 %v553
        %683 = vmatprep.subr.mxu0 %v556
        %684 = vmatpush1.msra.mxu0 %v555
        %685 = vmatprep.subr.mxu0 %v558
        %686 = vmatpush1.msra.mxu0 %v557
        %687 = vmatprep.subr.mxu0 %v560
        %688 = vmatpush1.msra.mxu0 %v559
        %689 = vmatprep.subr.mxu0 %v562
        %690 = vmatpush1.msra.mxu0 %v561
        %691 = vmatprep.subr.mxu0 %v564
        %692 = vmatpush1.msra.mxu0 %v563
        %693 = vmatprep.subr.mxu0 %v566
        %694 = vmatpush1.msra.mxu0 %v565
        %695 = vmatprep.subr.mxu0 %v568
        %696 = vmatpush1.msra.mxu0 %v567
        %697 = vmatprep.subr.mxu0 %v570
        %698 = vmatpush1.msra.mxu0 %v569
        %699 = vmatprep.subr.mxu0 %v572
        %700 = vmatpush1.msra.mxu0 %v571
        %701 = vmatprep.subr.mxu0 %v574
        %702 = vmatpush1.msra.mxu0 %v573
        %703 = vmatprep.subr.mxu0 %v576
        %704 = vmatpush1.msra.mxu0 %v575
        %705 = vmatprep.subr.mxu0 %v578
        %706 = vmatpush1.msra.mxu0 %v577
        %707 = vmatprep.subr.mxu0 %v580
        %708 = vmatpush1.msra.mxu0 %v579
        %709 = vmatprep.subr.mxu0 %v582
        %710 = vmatpush1.msra.mxu0 %v581
        %711 = vmatprep.subr.mxu0 %v584
        %712 = vmatpush1.msra.mxu0 %v583
        %713 = vmatprep.subr.mxu0 %v586
        %714 = vmatpush1.msra.mxu0 %v585
        %715 = vmatprep.subr.mxu0 %v588
        %716 = vmatpush1.msra.mxu0 %v587
        %717 = vmatprep.subr.mxu0 %v590
        %718 = vmatpush1.msra.mxu0 %v589
        %719 = vmatprep.subr.mxu0 %v592
        %720 = vmatpush1.msra.mxu0 %v591
        %721 = vmatprep.subr.mxu0 %v594
        %722 = vmatpush1.msra.mxu0 %v593
        %723 = vmatprep.subr.mxu0 %v596
        %724 = vmatpush1.msra.mxu0 %v595
        %725 = vmatprep.subr.mxu0 %v598
        %726 = vmatpush1.msra.mxu0 %v597
        %727 = vmatprep.subr.mxu0 %v600
        %728 = vmatpush1.msra.mxu0 %v599
        %729 = vmatprep.mubr.f32.mxu0 %v534
        %730 = vmatmul.mubr.f32.gmra.mrb[0].mxu0 %v533
        %v731 = vpop.f32.mrb[0].mxu0
        %v732 = vadd.f32 0.0, %v731
        %v733 = vpop.f32.mrb[0].mxu0
        %v734 = vadd.f32 0.0, %v733
        %735 = vdwg.mxu0
        %736 = vmatprep.subr.mxu0 %v602
        %737 = vmatpush1.msra.mxu0 %v601
        %738 = vmatprep.subr.mxu0 %v604
        %739 = vmatpush1.msra.mxu0 %v603
        %740 = vmatprep.subr.mxu0 %v606
        %741 = vmatpush1.msra.mxu0 %v605
        %742 = vmatprep.subr.mxu0 %v608
        %743 = vmatpush1.msra.mxu0 %v607
        %744 = vmatprep.subr.mxu0 %v610
        %745 = vmatpush1.msra.mxu0 %v609
        %746 = vmatprep.subr.mxu0 %v612
        %747 = vmatpush1.msra.mxu0 %v611
        %748 = vmatprep.subr.mxu0 %v614
        %749 = vmatpush1.msra.mxu0 %v613
        %750 = vmatprep.subr.mxu0 %v616
        %751 = vmatpush1.msra.mxu0 %v615
        %752 = vmatprep.subr.mxu0 %v618
        %753 = vmatpush1.msra.mxu0 %v617
        %754 = vmatprep.subr.mxu0 %v620
        %755 = vmatpush1.msra.mxu0 %v619
        %756 = vmatprep.subr.mxu0 %v622
        %757 = vmatpush1.msra.mxu0 %v621
        %758 = vmatprep.subr.mxu0 %v624
        %759 = vmatpush1.msra.mxu0 %v623
        %760 = vmatprep.subr.mxu0 %v626
        %761 = vmatpush1.msra.mxu0 %v625
        %762 = vmatprep.subr.mxu0 %v628
        %763 = vmatpush1.msra.mxu0 %v627
        %764 = vmatprep.subr.mxu0 %v630
        %765 = vmatpush1.msra.mxu0 %v629
        %766 = vmatprep.subr.mxu0 %v632
        %767 = vmatpush1.msra.mxu0 %v631
        %768 = vmatprep.subr.mxu0 %v634
        %769 = vmatpush1.msra.mxu0 %v633
        %770 = vmatprep.subr.mxu0 %v636
        %771 = vmatpush1.msra.mxu0 %v635
        %772 = vmatprep.subr.mxu0 %v638
        %773 = vmatpush1.msra.mxu0 %v637
        %774 = vmatprep.subr.mxu0 %v640
        %775 = vmatpush1.msra.mxu0 %v639
        %776 = vmatprep.subr.mxu0 %v642
        %777 = vmatpush1.msra.mxu0 %v641
        %778 = vmatprep.subr.mxu0 %v644
        %779 = vmatpush1.msra.mxu0 %v643
        %780 = vmatprep.subr.mxu0 %v646
        %781 = vmatpush1.msra.mxu0 %v645
        %782 = vmatprep.subr.mxu0 %v648
        %783 = vmatpush1.msra.mxu0 %v647
        %784 = vmatprep.subr.mxu0 %v650
        %785 = vmatpush1.msra.mxu0 %v649
        %786 = vmatprep.subr.mxu0 %v652
        %787 = vmatpush1.msra.mxu0 %v651
        %788 = vmatprep.subr.mxu0 %v654
        %789 = vmatpush1.msra.mxu0 %v653
        %790 = vmatprep.subr.mxu0 %v656
        %791 = vmatpush1.msra.mxu0 %v655
        %792 = vmatprep.subr.mxu0 %v658
        %793 = vmatpush1.msra.mxu0 %v657
        %794 = vmatprep.subr.mxu0 %v660
        %795 = vmatpush1.msra.mxu0 %v659
        %796 = vmatprep.subr.mxu0 %v662
        %797 = vmatpush1.msra.mxu0 %v661
        %798 = vmatprep.subr.mxu0 %v664
        %799 = vmatpush1.msra.mxu0 %v663
        %800 = vmatprep.mubr.f32.mxu0 %v536
        %801 = vmatmul.mubr.f32.gmra.mrb[0].mxu0 %v535
        %v802 = vpop.f32.mrb[0].mxu0
        %v803 = vadd.f32 %v732, %v802
        %v804 = vpop.f32.mrb[0].mxu0
        %v805 = vadd.f32 %v734, %v804
        %806 = vdwg.mxu0
        %v807 = vmul.f32 %v803, 0.999995
        %v808 = vmul.f32 %v805, 0.999995
        %v809 = vxor.u32 %v807, 2147483648
        %v810 = vxor.u32 %v808, 2147483648
        %v811 = vmul.f32 %v809, 1.442695
        %v812 = vpow.pop %v811
        %v813 = vmul.f32 %v810, 1.442695
        %v814 = vpow.pop %v813
        %v815 = vadd.f32 %v812, 1.0
        %v816 = vadd.f32 %v814, 1.0
        %v817 = vrcp.pop %v815
        %v818 = vmul.f32 1.0, %v817
        %v819 = vrcp.pop %v816
        %v820 = vmul.f32 1.0, %v819
        %v821 = vlaneseq
        %v822 = vshrl.u32 %v821, 7
        %v823 = vsub.s32 0, %v822
        %v824 = vrot.slane %v818, %v823
        %v825 = vlaneseq
        %v826 = vshrl.u32 %v825, 7
        %v827 = vsub.s32 0, %v826
        %v828 = vrot.slane %v820, %v827
        %v829 = vmul.f32 %v497, %v824
        %v830 = vmul.f32 %v498, %v828
        %v831 = vmul.f32 %v499, %v824
        %v832 = vmul.f32 %v500, %v828
        %833 = vst [vmem:[%s217] sm:$0xff] %v829
        %834 = vst [vmem:[%s217 + $0x8] sm:$0xff] %v830
        %835 = vst [vmem:[%s217 + $0x10] sm:$0xff] %v831
        %836 = vst [vmem:[%s217 + $0x18] sm:$0xff] %v832
        %s837 = sand.u32 %s98, 1
        %s838 = scalar_lea.sflag [#allocation4], %s837
        %s839 = sand.u32 %s98, 1
        %s840 = smul.addr %s839, 32
        %s841 = scalar_lea.vmem [#allocation9], %s840
        // Predicated region
        $region45: #{tpu_custom_call.1} parent=31 // pred_check
          %p842 = pneg %p108
        $region46: #{tpu_custom_call.1} parent=31 // pred_check_branch
          %844 = sbr.rel (%p842) target = $region48
        $region47: #{tpu_custom_call.1} parent=31 // pred_region
          %s846 = ssub.s32 512, 512
          %847 = vsyncadd %s838, %s846
          %s848 = smul.addr %s22, 4
          %s849 = smul.addr %s848, 128
          %s850 = scalar_lea.hbm %s3, %s849
          %s851 = sshll.u32 %s841, 4
          %s852 = int_to_ptr.vmem [resolvable:$true] %s851
          %857 = dma.vmem_to_hbm [thread:$0]  %s852, 512, %s850, %s838, 256, 256, 16
        $region48: #{tpu_custom_call.1} parent=31 // pred_fallthru
          _
      $region32: #{tpu_custom_call.1} parent=5 // pred_fallthru
        _
      %p858 = scmp.le.s32.totalorder 2, %s17
      // Predicated region
      $region49: #{tpu_custom_call.1} parent=5 // pred_check
        %p859 = pneg %p858
      $region50: #{tpu_custom_call.1} parent=5 // pred_check_branch
        %861 = sbr.rel (%p859) target = $region52
      $region51: #{tpu_custom_call.1} parent=5 // pred_region
        %s862 = ssub.s32 %s17, 2
        // Predicated region
        $region53: #{tpu_custom_call.1} parent=51 // pred_check
          %p863 = pneg %p114
        $region54: #{tpu_custom_call.1} parent=51 // pred_check_branch
          %865 = sbr.rel (%p863) target = $region56
        $region55: #{tpu_custom_call.1} parent=51 // pred_region
          %s866 = sand.u32 %s99, 1
          %s867 = scalar_lea.sflag [#allocation4], %s866
          %s868 = sand.u32 %s99, 1
          %s869 = smul.addr %s868, 32
          %s870 = scalar_lea.vmem [#allocation9], %s869
          %871 = dma.done %s867, 512
        $region56: #{tpu_custom_call.1} parent=51 // pred_fallthru
          _
      $region52: #{tpu_custom_call.1} parent=5 // pred_fallthru
        _
    $region6: #{tpu_custom_call.1} parent=1 // loop_footer
      %s21 = sadd.s32 1, %s17
    $region7: #{tpu_custom_call.1} parent=1 // loop_footer_branch
      %16 = sbr.rel target = $region3
    $region8: #{tpu_custom_call.1} parent=1 // loop_exit
      _
    %872 = vsyncpa [#allocation3], 1
    %s873 = scalar_lea.sflag [#allocation3], 1
    %874 = vsyncpa %s873, 1
    %875 = vsyncpa [#allocation7], 1
    %876 = vsyncpa [#allocation4], 1
    %s877 = scalar_lea.sflag [#allocation4], 1
    %878 = vsyncpa %s877, 1
    %879 = vsyncpa [#allocation5], 1
    %s880 = scalar_lea.sflag [#allocation5], 1
    %881 = vsyncpa %s880, 1

</llo_original>
